<compile_context>
chip_gen: v5e
topology: v5e:2x2
jax: 0.10.0
libtpu: 0.0.40
codegen_flags: <defaults>
</compile_context>

<pallas_src>
import functools

import jax
import jax.numpy as jnp
from jax.experimental import pallas as pl
from jax.experimental.pallas import tpu as pltpu


def gn_kernel(num_passes, dims,
              # graph data
              x_ref, e_ref, u_ref,
              # structure operators (dense one-hot / transposed one-hot)
              s_ref, d_ref, dt_ref, su_ref, un_ref, poolt_ref,
              # f32 reciprocal scalings (sum -> mean)
              inv_deg_ref, inv_cnt_ref,
              # packed parameters
              w_e1_ref, w_n1_ref, w_g1_ref, w2_ref, w_read_ref,
              b1_ref, b2_ref,
              # output
              out_ref):
    Fn, Fe, Fu = dims
    dot = lambda a, b: jnp.dot(a, b, preferred_element_type=jnp.float32)

    # ---- Hoisted loads (constant across passes) -------------------------------
    S = s_ref[...]          # [E, N] one_hot(src)
    D = d_ref[...]          # [E, N] one_hot(dst)
    DT = dt_ref[...]        # [N, E] one_hot(dst)^T  (scatter-sum edges -> dst)
    SU = su_ref[...]        # [E, B] one_hot(batch[src])
    Un = un_ref[...]        # [N, B] one_hot(batch)
    PoolT = poolt_ref[...]  # [B, N] one_hot(batch)^T (per-graph sum pool)
    inv_deg = inv_deg_ref[...]   # [N, 1]
    inv_cnt = inv_cnt_ref[...]   # [B, 1]

    W_e1 = w_e1_ref[...]         # [2Fn+Fe+Fu, H]
    W_n1 = w_n1_ref[...]         # [Fn+Fe+Fu, H]
    W_g1 = w_g1_ref[...]         # [Fu+Fn+Fe, H]
    W2 = w2_ref[...]             # [H, Fe+Fn+Fu]  (edge | node | global 2nd layers)
    W_read = w_read_ref[...]     # [Fn+Fe+Fu, C]
    b1 = b1_ref[...]             # [3, H]
    b2 = b2_ref[...]             # [1, Fe+Fn+Fu+C]

    W_e2 = W2[:, 0:Fe]
    W_n2 = W2[:, Fe:Fe + Fn]
    W_g2 = W2[:, Fe + Fn:Fe + Fn + Fu]
    b_e1 = b1[0:1, :]
    b_n1 = b1[1:2, :]
    b_g1 = b1[2:3, :]
    b_e2 = b2[:, 0:Fe]
    b_n2 = b2[:, Fe:Fe + Fn]
    b_g2 = b2[:, Fe + Fn:Fe + Fn + Fu]
    b_l = b2[:, Fe + Fn + Fu:]

    x = x_ref[...]          # [N, Fn]
    e = e_ref[...]          # [E, Fe]
    u = u_ref[...]          # [B, Fu]
    ebar = jnp.zeros((x.shape[0], Fe), jnp.float32)

    # ---- Message-passing loop --------------------------------------------------
    for _ in range(num_passes):
        # Gathers (dense one-hot matmuls).  u_edge is independent of u_node.
        x_src = dot(S, x)                         # [E, Fn]  node_attr[src]
        x_dst = dot(D, x)                         # [E, Fn]  node_attr[dst]
        u_edge = dot(SU, u)                       # [E, Fu]  u[batch[src]]

        # edge_model: single fused first-layer matmul over the concat slab.
        he = jnp.concatenate([x_src, x_dst, e, u_edge], axis=1)   # [E, 2Fn+Fe+Fu]
        he = jnp.maximum(dot(he, W_e1) + b_e1, 0.0)
        e = dot(he, W_e2) + b_e2                  # [E, Fe]

        # node_model: scatter-mean(edge -> dst) as sum-then-scale, fused MLP.
        ebar = dot(DT, e) * inv_deg               # [N, Fe]
        u_node = dot(Un, u)                       # [N, Fu]  u[batch]
        hn = jnp.concatenate([x, ebar, u_node], axis=1)           # [N, Fn+Fe+Fu]
        hn = jnp.maximum(dot(hn, W_n1) + b_n1, 0.0)
        x = dot(hn, W_n2) + b_n2                  # [N, Fn]

        # global_model: per-graph means, fused MLP.
        x_mean = dot(PoolT, x) * inv_cnt          # [B, Fn]
        e_mean = dot(PoolT, ebar) * inv_cnt       # [B, Fe]
        hg = jnp.concatenate([u, x_mean, e_mean], axis=1)         # [B, Fu+Fn+Fe]
        hg = jnp.maximum(dot(hg, W_g1) + b_g1, 0.0)
        u = dot(hg, W_g2) + b_g2                  # [B, Fu]

    # ---- Readout: lin(global_mean_pool(cat([x, ebar, u[batch]], 1))) -----------
    # mean over a graph's nodes of the broadcast u[batch] is exactly u (Pool@Un==I).
    px = dot(PoolT, x) * inv_cnt                  # [B, Fn]
    pe = dot(PoolT, ebar) * inv_cnt               # [B, Fe]
    g = jnp.concatenate([px, pe, u], axis=1)      # [B, Fn+Fe+Fu]
    out_ref[...] = dot(g, W_read) + b_l           # [B, C]


def gn_forward_pallas(node_attr, edge_attr, u, edge_index, batch, params,
                      num_passes, num_graphs, num_classes):
    (we_src, we_dst, we_e, we_u, be1, we2, be2,
     wn_x, wn_e, wn_u, bn1, wn2, bn2,
     wg_u, wg_x, wg_e, bg1, wg2, bg2,
     wl_x, wl_e, wl_u, bl) = params

    N, Fn = node_attr.shape
    E, Fe = edge_attr.shape
    Fu = u.shape[1]
    B = num_graphs
    src, dst = edge_index[0], edge_index[1]
    f32 = jnp.float32

    # ---- Structure operators (built once, outside the kernel) ------------------
    S = jax.nn.one_hot(src, N, dtype=f32)             # [E, N]
    D = jax.nn.one_hot(dst, N, dtype=f32)             # [E, N]
    DT = D.T                                          # [N, E]
    SU = jax.nn.one_hot(batch[src], B, dtype=f32)     # [E, B]  == S @ Un
    Un = jax.nn.one_hot(batch, B, dtype=f32)          # [N, B]
    PoolT = Un.T                                      # [B, N]
    in_deg = jnp.sum(D, axis=0)                       # [N]
    inv_deg = (1.0 / jnp.maximum(in_deg, 1.0))[:, None]   # [N, 1] f32
    cnt = jnp.sum(Un, axis=0)                         # [B]
    inv_cnt = (1.0 / jnp.maximum(cnt, 1.0))[:, None]      # [B, 1] f32

    # ---- Packed parameter slabs -------------------------------------------------
    W_e1 = jnp.concatenate([we_src, we_dst, we_e, we_u], axis=0)   # [2Fn+Fe+Fu, H]
    W_n1 = jnp.concatenate([wn_x, wn_e, wn_u], axis=0)             # [Fn+Fe+Fu, H]
    W_g1 = jnp.concatenate([wg_u, wg_x, wg_e], axis=0)             # [Fu+Fn+Fe, H]
    W2 = jnp.concatenate([we2, wn2, wg2], axis=1)                  # [H, Fe+Fn+Fu]
    W_read = jnp.concatenate([wl_x, wl_e, wl_u], axis=0)           # [Fn+Fe+Fu, C]
    b1 = jnp.concatenate([be1, bn1, bg1], axis=0)                  # [3, H]
    b2 = jnp.concatenate([be2, bn2, bg2, bl], axis=1)              # [1, Fe+Fn+Fu+C]

    args = [node_attr, edge_attr, u,
            S, D, DT, SU, Un, PoolT,
            inv_deg, inv_cnt,
            W_e1, W_n1, W_g1, W2, W_read, b1, b2]

    kernel = functools.partial(gn_kernel, num_passes, (Fn, Fe, Fu))
    return pl.pallas_call(
        kernel,
        out_shape=jax.ShapeDtypeStruct((B, num_classes), f32),
        in_specs=[pl.BlockSpec(memory_space=pltpu.MemorySpace.VMEM)] * len(args),
        out_specs=pl.BlockSpec(memory_space=pltpu.MemorySpace.VMEM),
        compiler_params=pltpu.CompilerParams(vmem_limit_bytes=32 * 1024 * 1024),
    )(*args)


def gn_forward_ref(node_attr, edge_attr, u, edge_index, batch, p, num_passes, B):
    """Pure-JAX reference using real gathers / segment ops."""
    (we_src, we_dst, we_e, we_u, be1, we2, be2,
     wn_x, wn_e, wn_u, bn1, wn2, bn2,
     wg_u, wg_x, wg_e, bg1, wg2, bg2,
     wl_x, wl_e, wl_u, bl) = p
    x, e = node_attr, edge_attr
    src, dst = edge_index[0], edge_index[1]
    N = x.shape[0]
    ebar = jnp.zeros((N, e.shape[1]), jnp.float32)
    for _ in range(num_passes):
        u_node = u[batch]
        h = jnp.maximum(x[src] @ we_src + x[dst] @ we_dst + e @ we_e
                        + u[batch[src]] @ we_u + be1, 0.0)
        e = h @ we2 + be2
        deg = jax.ops.segment_sum(jnp.ones(e.shape[0]), dst, num_segments=N)
        ebar = jax.ops.segment_sum(e, dst, num_segments=N) / jnp.maximum(deg, 1.0)[:, None]
        h = jnp.maximum(x @ wn_x + ebar @ wn_e + u_node @ wn_u + bn1, 0.0)
        x = h @ wn2 + bn2
        cnt = jax.ops.segment_sum(jnp.ones(N), batch, num_segments=B)
        x_mean = jax.ops.segment_sum(x, batch, num_segments=B) / cnt[:, None]
        e_mean = jax.ops.segment_sum(ebar, batch, num_segments=B) / cnt[:, None]
        h = jnp.maximum(u @ wg_u + x_mean @ wg_x + e_mean @ wg_e + bg1, 0.0)
        u = h @ wg2 + bg2
    g = jnp.concatenate([x, ebar, u[batch]], axis=1)
    cnt = jax.ops.segment_sum(jnp.ones(N), batch, num_segments=B)
    g = jax.ops.segment_sum(g, batch, num_segments=B) / cnt[:, None]
    W = jnp.concatenate([wl_x, wl_e, wl_u], axis=0)
    return g @ W + bl


if __name__ == "__main__":
    # MUTAG-like dims: 7 node features, 4 edge features, 2 classes; u dim = 3.
    Fn, Fe, Fu, H, C = 7, 4, 3, 32, 2
    num_passes = 2
    B = 2                       # graphs in the batch
    nodes_per_graph = 6
    N = B * nodes_per_graph

    # Deterministic small graphs: a bidirectional ring per graph.
    batch = jnp.repeat(jnp.arange(B, dtype=jnp.int32), nodes_per_graph)
    srcs, dsts = [], []
    for g in range(B):
        base = g * nodes_per_graph
        for i in range(nodes_per_graph):
            a = base + i
            b = base + (i + 1) % nodes_per_graph
            srcs += [a, b]
            dsts += [b, a]
    edge_index = jnp.array([srcs, dsts], dtype=jnp.int32)
    E = edge_index.shape[1]

    key = jax.random.PRNGKey(0)
    ks = jax.random.split(key, 32)
    node_attr = jax.random.normal(ks[0], (N, Fn), jnp.float32)
    edge_attr = jax.random.normal(ks[1], (E, Fe), jnp.float32)
    u = jax.random.normal(ks[2], (B, Fu), jnp.float32)

    def w(k, shape):
        return 0.2 * jax.random.normal(k, shape, jnp.float32)

    params = [
        # edge MLP: (2*Fn + Fe + Fu) -> H -> Fe
        w(ks[3], (Fn, H)), w(ks[4], (Fn, H)), w(ks[5], (Fe, H)), w(ks[6], (Fu, H)),
        w(ks[7], (1, H)), w(ks[8], (H, Fe)), w(ks[9], (1, Fe)),
        # node MLP: (Fn + Fe + Fu) -> H -> Fn
        w(ks[10], (Fn, H)), w(ks[11], (Fe, H)), w(ks[12], (Fu, H)),
        w(ks[13], (1, H)), w(ks[14], (H, Fn)), w(ks[15], (1, Fn)),
        # global MLP: (Fu + Fn + Fe) -> H -> Fu
        w(ks[16], (Fu, H)), w(ks[17], (Fn, H)), w(ks[18], (Fe, H)),
        w(ks[19], (1, H)), w(ks[20], (H, Fu)), w(ks[21], (1, Fu)),
        # readout linear: (Fn + Fe + Fu) -> C
        w(ks[22], (Fn, C)), w(ks[23], (Fe, C)), w(ks[24], (Fu, C)), w(ks[25], (1, C)),
    ]

    out = gn_forward_pallas(node_attr, edge_attr, u, edge_index, batch, params,
                            num_passes, B, C)
    out = jax.block_until_ready(out)

    ref = gn_forward_ref(node_attr, edge_attr, u, edge_index, batch, params,
                         num_passes, B)
    assert out.shape == (B, C)
    assert jnp.allclose(out, ref, rtol=1e-4, atol=1e-4), (out, ref)
    print("KERNEL_OK")
</pallas_src>

<mosaic_0001>
module attributes {stable_mosaic.version = 11 : i64} {
  func.func @gn_kernel(%arg0: memref<12x7xf32, #tpu.memory_space<vmem>>, %arg1: memref<24x4xf32, #tpu.memory_space<vmem>>, %arg2: memref<2x3xf32, #tpu.memory_space<vmem>>, %arg3: memref<24x12xf32, #tpu.memory_space<vmem>>, %arg4: memref<24x12xf32, #tpu.memory_space<vmem>>, %arg5: memref<12x24xf32, #tpu.memory_space<vmem>>, %arg6: memref<24x2xf32, #tpu.memory_space<vmem>>, %arg7: memref<12x2xf32, #tpu.memory_space<vmem>>, %arg8: memref<2x12xf32, #tpu.memory_space<vmem>>, %arg9: memref<12x1xf32, #tpu.memory_space<vmem>>, %arg10: memref<2x1xf32, #tpu.memory_space<vmem>>, %arg11: memref<21x32xf32, #tpu.memory_space<vmem>>, %arg12: memref<14x32xf32, #tpu.memory_space<vmem>>, %arg13: memref<14x32xf32, #tpu.memory_space<vmem>>, %arg14: memref<32x14xf32, #tpu.memory_space<vmem>>, %arg15: memref<14x2xf32, #tpu.memory_space<vmem>>, %arg16: memref<3x32xf32, #tpu.memory_space<vmem>>, %arg17: memref<1x16xf32, #tpu.memory_space<vmem>>, %arg18: memref<2x2xf32, #tpu.memory_space<vmem>>) attributes {dimension_semantics = [], scalar_prefetch = 0 : i64, scratch_operands = 0 : i64, tpu.core_type = #tpu.core_type<tc>} {
    %c0 = arith.constant 0 : index
    %c0_0 = arith.constant 0 : index
    %0 = vector.load %arg3[%c0, %c0_0] : memref<24x12xf32, #tpu.memory_space<vmem>>, vector<24x12xf32>
    %c0_1 = arith.constant 0 : index
    %c0_2 = arith.constant 0 : index
    %1 = vector.load %arg4[%c0_1, %c0_2] : memref<24x12xf32, #tpu.memory_space<vmem>>, vector<24x12xf32>
    %c0_3 = arith.constant 0 : index
    %c0_4 = arith.constant 0 : index
    %2 = vector.load %arg5[%c0_3, %c0_4] : memref<12x24xf32, #tpu.memory_space<vmem>>, vector<12x24xf32>
    %c0_5 = arith.constant 0 : index
    %c0_6 = arith.constant 0 : index
    %3 = vector.load %arg6[%c0_5, %c0_6] : memref<24x2xf32, #tpu.memory_space<vmem>>, vector<24x2xf32>
    %c0_7 = arith.constant 0 : index
    %c0_8 = arith.constant 0 : index
    %4 = vector.load %arg7[%c0_7, %c0_8] : memref<12x2xf32, #tpu.memory_space<vmem>>, vector<12x2xf32>
    %c0_9 = arith.constant 0 : index
    %c0_10 = arith.constant 0 : index
    %5 = vector.load %arg8[%c0_9, %c0_10] : memref<2x12xf32, #tpu.memory_space<vmem>>, vector<2x12xf32>
    %c0_11 = arith.constant 0 : index
    %c0_12 = arith.constant 0 : index
    %6 = vector.load %arg9[%c0_11, %c0_12] : memref<12x1xf32, #tpu.memory_space<vmem>>, vector<12x1xf32>
    %c0_13 = arith.constant 0 : index
    %c0_14 = arith.constant 0 : index
    %7 = vector.load %arg10[%c0_13, %c0_14] : memref<2x1xf32, #tpu.memory_space<vmem>>, vector<2x1xf32>
    %c0_15 = arith.constant 0 : index
    %c0_16 = arith.constant 0 : index
    %8 = vector.load %arg11[%c0_15, %c0_16] : memref<21x32xf32, #tpu.memory_space<vmem>>, vector<21x32xf32>
    %c0_17 = arith.constant 0 : index
    %c0_18 = arith.constant 0 : index
    %9 = vector.load %arg12[%c0_17, %c0_18] : memref<14x32xf32, #tpu.memory_space<vmem>>, vector<14x32xf32>
    %c0_19 = arith.constant 0 : index
    %c0_20 = arith.constant 0 : index
    %10 = vector.load %arg13[%c0_19, %c0_20] : memref<14x32xf32, #tpu.memory_space<vmem>>, vector<14x32xf32>
    %c0_21 = arith.constant 0 : index
    %c0_22 = arith.constant 0 : index
    %11 = vector.load %arg14[%c0_21, %c0_22] : memref<32x14xf32, #tpu.memory_space<vmem>>, vector<32x14xf32>
    %c0_23 = arith.constant 0 : index
    %c0_24 = arith.constant 0 : index
    %12 = vector.load %arg15[%c0_23, %c0_24] : memref<14x2xf32, #tpu.memory_space<vmem>>, vector<14x2xf32>
    %c0_25 = arith.constant 0 : index
    %c0_26 = arith.constant 0 : index
    %13 = vector.load %arg16[%c0_25, %c0_26] : memref<3x32xf32, #tpu.memory_space<vmem>>, vector<3x32xf32>
    %c0_27 = arith.constant 0 : index
    %c0_28 = arith.constant 0 : index
    %14 = vector.load %arg17[%c0_27, %c0_28] : memref<1x16xf32, #tpu.memory_space<vmem>>, vector<1x16xf32>
    %15 = vector.extract_strided_slice %11 {offsets = [0, 0], sizes = [32, 4], strides = [1, 1]} : vector<32x14xf32> to vector<32x4xf32>
    %16 = vector.extract_strided_slice %11 {offsets = [0, 4], sizes = [32, 7], strides = [1, 1]} : vector<32x14xf32> to vector<32x7xf32>
    %17 = vector.extract_strided_slice %11 {offsets = [0, 11], sizes = [32, 3], strides = [1, 1]} : vector<32x14xf32> to vector<32x3xf32>
    %18 = vector.extract_strided_slice %13 {offsets = [0, 0], sizes = [1, 32], strides = [1, 1]} : vector<3x32xf32> to vector<1x32xf32>
    %19 = vector.extract_strided_slice %13 {offsets = [1, 0], sizes = [1, 32], strides = [1, 1]} : vector<3x32xf32> to vector<1x32xf32>
    %20 = vector.extract_strided_slice %13 {offsets = [2, 0], sizes = [1, 32], strides = [1, 1]} : vector<3x32xf32> to vector<1x32xf32>
    %21 = vector.extract_strided_slice %14 {offsets = [0, 0], sizes = [1, 4], strides = [1, 1]} : vector<1x16xf32> to vector<1x4xf32>
    %22 = vector.extract_strided_slice %14 {offsets = [0, 4], sizes = [1, 7], strides = [1, 1]} : vector<1x16xf32> to vector<1x7xf32>
    %23 = vector.extract_strided_slice %14 {offsets = [0, 11], sizes = [1, 3], strides = [1, 1]} : vector<1x16xf32> to vector<1x3xf32>
    %24 = vector.extract_strided_slice %14 {offsets = [0, 14], sizes = [1, 2], strides = [1, 1]} : vector<1x16xf32> to vector<1x2xf32>
    %c0_29 = arith.constant 0 : index
    %c0_30 = arith.constant 0 : index
    %25 = vector.load %arg0[%c0_29, %c0_30] : memref<12x7xf32, #tpu.memory_space<vmem>>, vector<12x7xf32>
    %c0_31 = arith.constant 0 : index
    %c0_32 = arith.constant 0 : index
    %26 = vector.load %arg1[%c0_31, %c0_32] : memref<24x4xf32, #tpu.memory_space<vmem>>, vector<24x4xf32>
    %c0_33 = arith.constant 0 : index
    %c0_34 = arith.constant 0 : index
    %27 = vector.load %arg2[%c0_33, %c0_34] : memref<2x3xf32, #tpu.memory_space<vmem>>, vector<2x3xf32>
    %cst = arith.constant dense<0.000000e+00> : vector<24x7xf32>
    %28 = tpu.matmul %0, %25, %cst {dimension_numbers = #tpu.dot_dimension_numbers<[1], [0], [0], [1], [0, 0, 1, 1], [], []>} : vector<24x12xf32>, vector<12x7xf32>, vector<24x7xf32> -> vector<24x7xf32>
    %cst_35 = arith.constant dense<0.000000e+00> : vector<24x7xf32>
    %29 = tpu.matmul %1, %25, %cst_35 {dimension_numbers = #tpu.dot_dimension_numbers<[1], [0], [0], [1], [0, 0, 1, 1], [], []>} : vector<24x12xf32>, vector<12x7xf32>, vector<24x7xf32> -> vector<24x7xf32>
    %cst_36 = arith.constant dense<0.000000e+00> : vector<24x3xf32>
    %30 = tpu.matmul %3, %27, %cst_36 {dimension_numbers = #tpu.dot_dimension_numbers<[1], [0], [0], [1], [0, 0, 1, 1], [], []>} : vector<24x2xf32>, vector<2x3xf32>, vector<24x3xf32> -> vector<24x3xf32>
    %31 = tpu.concatenate %28, %29, %26, %30 in 1 : vector<24x7xf32>, vector<24x7xf32>, vector<24x4xf32>, vector<24x3xf32> -> vector<24x21xf32>
    %cst_37 = arith.constant dense<0.000000e+00> : vector<24x32xf32>
    %32 = tpu.matmul %31, %8, %cst_37 {dimension_numbers = #tpu.dot_dimension_numbers<[1], [0], [0], [1], [0, 0, 1, 1], [], []>} : vector<24x21xf32>, vector<21x32xf32>, vector<24x32xf32> -> vector<24x32xf32>
    %33 = vector.broadcast %18 : vector<1x32xf32> to vector<24x32xf32>
    %34 = arith.addf %32, %33 : vector<24x32xf32>
    %cst_38 = arith.constant 0.000000e+00 : f32
    %35 = vector.broadcast %cst_38 : f32 to vector<24x32xf32>
    %36 = arith.maximumf %34, %35 : vector<24x32xf32>
    %cst_39 = arith.constant dense<0.000000e+00> : vector<24x4xf32>
    %37 = tpu.matmul %36, %15, %cst_39 {dimension_numbers = #tpu.dot_dimension_numbers<[1], [0], [0], [1], [0, 0, 1, 1], [], []>} : vector<24x32xf32>, vector<32x4xf32>, vector<24x4xf32> -> vector<24x4xf32>
    %38 = vector.broadcast %21 : vector<1x4xf32> to vector<24x4xf32>
    %39 = arith.addf %37, %38 : vector<24x4xf32>
    %cst_40 = arith.constant dense<0.000000e+00> : vector<12x4xf32>
    %40 = tpu.matmul %2, %39, %cst_40 {dimension_numbers = #tpu.dot_dimension_numbers<[1], [0], [0], [1], [0, 0, 1, 1], [], []>} : vector<12x24xf32>, vector<24x4xf32>, vector<12x4xf32> -> vector<12x4xf32>
    %41 = vector.broadcast %6 : vector<12x1xf32> to vector<12x4xf32>
    %42 = arith.mulf %40, %41 : vector<12x4xf32>
    %cst_41 = arith.constant dense<0.000000e+00> : vector<12x3xf32>
    %43 = tpu.matmul %4, %27, %cst_41 {dimension_numbers = #tpu.dot_dimension_numbers<[1], [0], [0], [1], [0, 0, 1, 1], [], []>} : vector<12x2xf32>, vector<2x3xf32>, vector<12x3xf32> -> vector<12x3xf32>
    %44 = tpu.concatenate %25, %42, %43 in 1 : vector<12x7xf32>, vector<12x4xf32>, vector<12x3xf32> -> vector<12x14xf32>
    %cst_42 = arith.constant dense<0.000000e+00> : vector<12x32xf32>
    %45 = tpu.matmul %44, %9, %cst_42 {dimension_numbers = #tpu.dot_dimension_numbers<[1], [0], [0], [1], [0, 0, 1, 1], [], []>} : vector<12x14xf32>, vector<14x32xf32>, vector<12x32xf32> -> vector<12x32xf32>
    %46 = vector.broadcast %19 : vector<1x32xf32> to vector<12x32xf32>
    %47 = arith.addf %45, %46 : vector<12x32xf32>
    %cst_43 = arith.constant 0.000000e+00 : f32
    %48 = vector.broadcast %cst_43 : f32 to vector<12x32xf32>
    %49 = arith.maximumf %47, %48 : vector<12x32xf32>
    %cst_44 = arith.constant dense<0.000000e+00> : vector<12x7xf32>
    %50 = tpu.matmul %49, %16, %cst_44 {dimension_numbers = #tpu.dot_dimension_numbers<[1], [0], [0], [1], [0, 0, 1, 1], [], []>} : vector<12x32xf32>, vector<32x7xf32>, vector<12x7xf32> -> vector<12x7xf32>
    %51 = vector.broadcast %22 : vector<1x7xf32> to vector<12x7xf32>
    %52 = arith.addf %50, %51 : vector<12x7xf32>
    %cst_45 = arith.constant dense<0.000000e+00> : vector<2x7xf32>
    %53 = tpu.matmul %5, %52, %cst_45 {dimension_numbers = #tpu.dot_dimension_numbers<[1], [0], [0], [1], [0, 0, 1, 1], [], []>} : vector<2x12xf32>, vector<12x7xf32>, vector<2x7xf32> -> vector<2x7xf32>
    %54 = vector.broadcast %7 : vector<2x1xf32> to vector<2x7xf32>
    %55 = arith.mulf %53, %54 : vector<2x7xf32>
    %cst_46 = arith.constant dense<0.000000e+00> : vector<2x4xf32>
    %56 = tpu.matmul %5, %42, %cst_46 {dimension_numbers = #tpu.dot_dimension_numbers<[1], [0], [0], [1], [0, 0, 1, 1], [], []>} : vector<2x12xf32>, vector<12x4xf32>, vector<2x4xf32> -> vector<2x4xf32>
    %57 = vector.broadcast %7 : vector<2x1xf32> to vector<2x4xf32>
    %58 = arith.mulf %56, %57 : vector<2x4xf32>
    %59 = tpu.concatenate %27, %55, %58 in 1 : vector<2x3xf32>, vector<2x7xf32>, vector<2x4xf32> -> vector<2x14xf32>
    %cst_47 = arith.constant dense<0.000000e+00> : vector<2x32xf32>
    %60 = tpu.matmul %59, %10, %cst_47 {dimension_numbers = #tpu.dot_dimension_numbers<[1], [0], [0], [1], [0, 0, 1, 1], [], []>} : vector<2x14xf32>, vector<14x32xf32>, vector<2x32xf32> -> vector<2x32xf32>
    %61 = vector.broadcast %20 : vector<1x32xf32> to vector<2x32xf32>
    %62 = arith.addf %60, %61 : vector<2x32xf32>
    %cst_48 = arith.constant 0.000000e+00 : f32
    %63 = vector.broadcast %cst_48 : f32 to vector<2x32xf32>
    %64 = arith.maximumf %62, %63 : vector<2x32xf32>
    %cst_49 = arith.constant dense<0.000000e+00> : vector<2x3xf32>
    %65 = tpu.matmul %64, %17, %cst_49 {dimension_numbers = #tpu.dot_dimension_numbers<[1], [0], [0], [1], [0, 0, 1, 1], [], []>} : vector<2x32xf32>, vector<32x3xf32>, vector<2x3xf32> -> vector<2x3xf32>
    %66 = vector.broadcast %23 : vector<1x3xf32> to vector<2x3xf32>
    %67 = arith.addf %65, %66 : vector<2x3xf32>
    %cst_50 = arith.constant dense<0.000000e+00> : vector<24x7xf32>
    %68 = tpu.matmul %0, %52, %cst_50 {dimension_numbers = #tpu.dot_dimension_numbers<[1], [0], [0], [1], [0, 0, 1, 1], [], []>} : vector<24x12xf32>, vector<12x7xf32>, vector<24x7xf32> -> vector<24x7xf32>
    %cst_51 = arith.constant dense<0.000000e+00> : vector<24x7xf32>
    %69 = tpu.matmul %1, %52, %cst_51 {dimension_numbers = #tpu.dot_dimension_numbers<[1], [0], [0], [1], [0, 0, 1, 1], [], []>} : vector<24x12xf32>, vector<12x7xf32>, vector<24x7xf32> -> vector<24x7xf32>
    %cst_52 = arith.constant dense<0.000000e+00> : vector<24x3xf32>
    %70 = tpu.matmul %3, %67, %cst_52 {dimension_numbers = #tpu.dot_dimension_numbers<[1], [0], [0], [1], [0, 0, 1, 1], [], []>} : vector<24x2xf32>, vector<2x3xf32>, vector<24x3xf32> -> vector<24x3xf32>
    %71 = tpu.concatenate %68, %69, %39, %70 in 1 : vector<24x7xf32>, vector<24x7xf32>, vector<24x4xf32>, vector<24x3xf32> -> vector<24x21xf32>
    %cst_53 = arith.constant dense<0.000000e+00> : vector<24x32xf32>
    %72 = tpu.matmul %71, %8, %cst_53 {dimension_numbers = #tpu.dot_dimension_numbers<[1], [0], [0], [1], [0, 0, 1, 1], [], []>} : vector<24x21xf32>, vector<21x32xf32>, vector<24x32xf32> -> vector<24x32xf32>
    %73 = vector.broadcast %18 : vector<1x32xf32> to vector<24x32xf32>
    %74 = arith.addf %72, %73 : vector<24x32xf32>
    %cst_54 = arith.constant 0.000000e+00 : f32
    %75 = vector.broadcast %cst_54 : f32 to vector<24x32xf32>
    %76 = arith.maximumf %74, %75 : vector<24x32xf32>
    %cst_55 = arith.constant dense<0.000000e+00> : vector<24x4xf32>
    %77 = tpu.matmul %76, %15, %cst_55 {dimension_numbers = #tpu.dot_dimension_numbers<[1], [0], [0], [1], [0, 0, 1, 1], [], []>} : vector<24x32xf32>, vector<32x4xf32>, vector<24x4xf32> -> vector<24x4xf32>
    %78 = vector.broadcast %21 : vector<1x4xf32> to vector<24x4xf32>
    %79 = arith.addf %77, %78 : vector<24x4xf32>
    %cst_56 = arith.constant dense<0.000000e+00> : vector<12x4xf32>
    %80 = tpu.matmul %2, %79, %cst_56 {dimension_numbers = #tpu.dot_dimension_numbers<[1], [0], [0], [1], [0, 0, 1, 1], [], []>} : vector<12x24xf32>, vector<24x4xf32>, vector<12x4xf32> -> vector<12x4xf32>
    %81 = vector.broadcast %6 : vector<12x1xf32> to vector<12x4xf32>
    %82 = arith.mulf %80, %81 : vector<12x4xf32>
    %cst_57 = arith.constant dense<0.000000e+00> : vector<12x3xf32>
    %83 = tpu.matmul %4, %67, %cst_57 {dimension_numbers = #tpu.dot_dimension_numbers<[1], [0], [0], [1], [0, 0, 1, 1], [], []>} : vector<12x2xf32>, vector<2x3xf32>, vector<12x3xf32> -> vector<12x3xf32>
    %84 = tpu.concatenate %52, %82, %83 in 1 : vector<12x7xf32>, vector<12x4xf32>, vector<12x3xf32> -> vector<12x14xf32>
    %cst_58 = arith.constant dense<0.000000e+00> : vector<12x32xf32>
    %85 = tpu.matmul %84, %9, %cst_58 {dimension_numbers = #tpu.dot_dimension_numbers<[1], [0], [0], [1], [0, 0, 1, 1], [], []>} : vector<12x14xf32>, vector<14x32xf32>, vector<12x32xf32> -> vector<12x32xf32>
    %86 = vector.broadcast %19 : vector<1x32xf32> to vector<12x32xf32>
    %87 = arith.addf %85, %86 : vector<12x32xf32>
    %cst_59 = arith.constant 0.000000e+00 : f32
    %88 = vector.broadcast %cst_59 : f32 to vector<12x32xf32>
    %89 = arith.maximumf %87, %88 : vector<12x32xf32>
    %cst_60 = arith.constant dense<0.000000e+00> : vector<12x7xf32>
    %90 = tpu.matmul %89, %16, %cst_60 {dimension_numbers = #tpu.dot_dimension_numbers<[1], [0], [0], [1], [0, 0, 1, 1], [], []>} : vector<12x32xf32>, vector<32x7xf32>, vector<12x7xf32> -> vector<12x7xf32>
    %91 = vector.broadcast %22 : vector<1x7xf32> to vector<12x7xf32>
    %92 = arith.addf %90, %91 : vector<12x7xf32>
    %cst_61 = arith.constant dense<0.000000e+00> : vector<2x7xf32>
    %93 = tpu.matmul %5, %92, %cst_61 {dimension_numbers = #tpu.dot_dimension_numbers<[1], [0], [0], [1], [0, 0, 1, 1], [], []>} : vector<2x12xf32>, vector<12x7xf32>, vector<2x7xf32> -> vector<2x7xf32>
    %94 = vector.broadcast %7 : vector<2x1xf32> to vector<2x7xf32>
    %95 = arith.mulf %93, %94 : vector<2x7xf32>
    %cst_62 = arith.constant dense<0.000000e+00> : vector<2x4xf32>
    %96 = tpu.matmul %5, %82, %cst_62 {dimension_numbers = #tpu.dot_dimension_numbers<[1], [0], [0], [1], [0, 0, 1, 1], [], []>} : vector<2x12xf32>, vector<12x4xf32>, vector<2x4xf32> -> vector<2x4xf32>
    %97 = vector.broadcast %7 : vector<2x1xf32> to vector<2x4xf32>
    %98 = arith.mulf %96, %97 : vector<2x4xf32>
    %99 = tpu.concatenate %67, %95, %98 in 1 : vector<2x3xf32>, vector<2x7xf32>, vector<2x4xf32> -> vector<2x14xf32>
    %cst_63 = arith.constant dense<0.000000e+00> : vector<2x32xf32>
    %100 = tpu.matmul %99, %10, %cst_63 {dimension_numbers = #tpu.dot_dimension_numbers<[1], [0], [0], [1], [0, 0, 1, 1], [], []>} : vector<2x14xf32>, vector<14x32xf32>, vector<2x32xf32> -> vector<2x32xf32>
    %101 = vector.broadcast %20 : vector<1x32xf32> to vector<2x32xf32>
    %102 = arith.addf %100, %101 : vector<2x32xf32>
    %cst_64 = arith.constant 0.000000e+00 : f32
    %103 = vector.broadcast %cst_64 : f32 to vector<2x32xf32>
    %104 = arith.maximumf %102, %103 : vector<2x32xf32>
    %cst_65 = arith.constant dense<0.000000e+00> : vector<2x3xf32>
    %105 = tpu.matmul %104, %17, %cst_65 {dimension_numbers = #tpu.dot_dimension_numbers<[1], [0], [0], [1], [0, 0, 1, 1], [], []>} : vector<2x32xf32>, vector<32x3xf32>, vector<2x3xf32> -> vector<2x3xf32>
    %106 = vector.broadcast %23 : vector<1x3xf32> to vector<2x3xf32>
    %107 = arith.addf %105, %106 : vector<2x3xf32>
    %cst_66 = arith.constant dense<0.000000e+00> : vector<2x7xf32>
    %108 = tpu.matmul %5, %92, %cst_66 {dimension_numbers = #tpu.dot_dimension_numbers<[1], [0], [0], [1], [0, 0, 1, 1], [], []>} : vector<2x12xf32>, vector<12x7xf32>, vector<2x7xf32> -> vector<2x7xf32>
    %109 = vector.broadcast %7 : vector<2x1xf32> to vector<2x7xf32>
    %110 = arith.mulf %108, %109 : vector<2x7xf32>
    %cst_67 = arith.constant dense<0.000000e+00> : vector<2x4xf32>
    %111 = tpu.matmul %5, %82, %cst_67 {dimension_numbers = #tpu.dot_dimension_numbers<[1], [0], [0], [1], [0, 0, 1, 1], [], []>} : vector<2x12xf32>, vector<12x4xf32>, vector<2x4xf32> -> vector<2x4xf32>
    %112 = vector.broadcast %7 : vector<2x1xf32> to vector<2x4xf32>
    %113 = arith.mulf %111, %112 : vector<2x4xf32>
    %114 = tpu.concatenate %110, %113, %107 in 1 : vector<2x7xf32>, vector<2x4xf32>, vector<2x3xf32> -> vector<2x14xf32>
    %cst_68 = arith.constant dense<0.000000e+00> : vector<2x2xf32>
    %115 = tpu.matmul %114, %12, %cst_68 {dimension_numbers = #tpu.dot_dimension_numbers<[1], [0], [0], [1], [0, 0, 1, 1], [], []>} : vector<2x14xf32>, vector<14x2xf32>, vector<2x2xf32> -> vector<2x2xf32>
    %116 = vector.broadcast %24 : vector<1x2xf32> to vector<2x2xf32>
    %117 = arith.addf %115, %116 : vector<2x2xf32>
    %c0_69 = arith.constant 0 : index
    %c0_70 = arith.constant 0 : index
    %118 = vector.load %arg18[%c0_69, %c0_70] : memref<2x2xf32, #tpu.memory_space<vmem>>, vector<2x2xf32>
    tpu.vector_store %arg18[%c0_69, %c0_70], %117 {strides = array<i32>} : memref<2x2xf32, #tpu.memory_space<vmem>>, vector<2x2xf32>,
    return
  }
}

</mosaic_0001>

<llo_original>
// kernel: tpu_custom_call.1
$region0: #{tpu_custom_call.1}
  #allocation0 [shape = 'u32[]', space=smem, size = 0x4, offset = 0x4, fixed_abs, tag = 'smem constant byte address 0x4 - core index']
  #allocation1 [shape = 'u32[72,128]{1,0:T(1,128)}', space=vmem, size = 0x9000, scoped, tag = 'internal scratch']
  %s0 = inlined_call_operand.vmem [shape: f32[12,7], index: 0, kind: input, shape index: {}]
  %s1 = inlined_call_operand.vmem [shape: f32[24,4], index: 1, kind: input, shape index: {}]
  %s2 = inlined_call_operand.vmem [shape: f32[2,3], index: 2, kind: input, shape index: {}]
  %s3 = inlined_call_operand.vmem [shape: f32[24,12], index: 3, kind: input, shape index: {}]
  %s4 = inlined_call_operand.vmem [shape: f32[24,12], index: 4, kind: input, shape index: {}]
  %s5 = inlined_call_operand.vmem [shape: f32[12,24], index: 5, kind: input, shape index: {}]
  %s6 = inlined_call_operand.vmem [shape: f32[24,2], index: 6, kind: input, shape index: {}]
  %s7 = inlined_call_operand.vmem [shape: f32[12,2], index: 7, kind: input, shape index: {}]
  %s8 = inlined_call_operand.vmem [shape: f32[2,12], index: 8, kind: input, shape index: {}]
  %s9 = inlined_call_operand.vmem [shape: f32[12,1], index: 9, kind: input, shape index: {}]
  %s10 = inlined_call_operand.vmem [shape: f32[2,1], index: 10, kind: input, shape index: {}]
  %s11 = inlined_call_operand.vmem [shape: f32[21,32], index: 11, kind: input, shape index: {}]
  %s12 = inlined_call_operand.vmem [shape: f32[14,32], index: 12, kind: input, shape index: {}]
  %s13 = inlined_call_operand.vmem [shape: f32[14,32], index: 13, kind: input, shape index: {}]
  %s14 = inlined_call_operand.vmem [shape: f32[32,14], index: 14, kind: input, shape index: {}]
  %s15 = inlined_call_operand.vmem [shape: f32[14,2], index: 15, kind: input, shape index: {}]
  %s16 = inlined_call_operand.vmem [shape: f32[3,32], index: 16, kind: input, shape index: {}]
  %s17 = inlined_call_operand.vmem [shape: f32[1,16], index: 17, kind: input, shape index: {}]
  %s18 = inlined_call_operand.hbm [shape: f32[2,2], index: 18, kind: output, shape index: {}]
  %s19 = sld [smem:[#allocation0]]
  $region82: #{tpu_custom_call.1} parent=0
    _
  %s21 = ssub.s32 1, %s19
  %s22 = scalar_select 0, %s21, %s19
  $region1: #{tpu_custom_call.1} parent=0
    #allocation2 [shape = 'u8[1024]{0}', space=vmem, size = 0x400, scoped, tag = 'output window, operand 0, single buffered']
    #allocation3 [shape = 's32[1]{0}', space=sflag, size = 0x4, scoped, tag = 'scoped memory for tpu_custom_call.1']
    %23 = vsyncpa [#allocation3], 0
    // Predicated region
    $region2: #{tpu_custom_call.1} parent=1 // pred_check
      _
    $region3: #{tpu_custom_call.1} parent=1 // pred_check_branch
      %25 = sbr.rel (0) target = $region5
    $region4: #{tpu_custom_call.1} parent=1 // pred_region
      _
    $region5: #{tpu_custom_call.1} parent=1 // pred_fallthru
      _
    // Predicated region
    $region6: #{tpu_custom_call.1} parent=1 // pred_check
      _
    $region7: #{tpu_custom_call.1} parent=1 // pred_check_branch
      %27 = sbr.rel (0) target = $region9
    $region8: #{tpu_custom_call.1} parent=1 // pred_region
      _
    $region9: #{tpu_custom_call.1} parent=1 // pred_fallthru
      _
    // Predicated region
    $region10: #{tpu_custom_call.1} parent=1 // pred_check
      _
    $region11: #{tpu_custom_call.1} parent=1 // pred_check_branch
      %29 = sbr.rel (0) target = $region13
    $region12: #{tpu_custom_call.1} parent=1 // pred_region
      _
    $region13: #{tpu_custom_call.1} parent=1 // pred_fallthru
      _
    // Predicated region
    $region14: #{tpu_custom_call.1} parent=1 // pred_check
      _
    $region15: #{tpu_custom_call.1} parent=1 // pred_check_branch
      %31 = sbr.rel (0) target = $region17
    $region16: #{tpu_custom_call.1} parent=1 // pred_region
      _
    $region17: #{tpu_custom_call.1} parent=1 // pred_fallthru
      _
    // Predicated region
    $region18: #{tpu_custom_call.1} parent=1 // pred_check
      _
    $region19: #{tpu_custom_call.1} parent=1 // pred_check_branch
      %33 = sbr.rel (0) target = $region21
    $region20: #{tpu_custom_call.1} parent=1 // pred_region
      _
    $region21: #{tpu_custom_call.1} parent=1 // pred_fallthru
      _
    // Predicated region
    $region22: #{tpu_custom_call.1} parent=1 // pred_check
      _
    $region23: #{tpu_custom_call.1} parent=1 // pred_check_branch
      %35 = sbr.rel (0) target = $region25
    $region24: #{tpu_custom_call.1} parent=1 // pred_region
      _
    $region25: #{tpu_custom_call.1} parent=1 // pred_fallthru
      _
    // Predicated region
    $region26: #{tpu_custom_call.1} parent=1 // pred_check
      _
    $region27: #{tpu_custom_call.1} parent=1 // pred_check_branch
      %37 = sbr.rel (0) target = $region29
    $region28: #{tpu_custom_call.1} parent=1 // pred_region
      _
    $region29: #{tpu_custom_call.1} parent=1 // pred_fallthru
      _
    // Predicated region
    $region30: #{tpu_custom_call.1} parent=1 // pred_check
      _
    $region31: #{tpu_custom_call.1} parent=1 // pred_check_branch
      %39 = sbr.rel (0) target = $region33
    $region32: #{tpu_custom_call.1} parent=1 // pred_region
      _
    $region33: #{tpu_custom_call.1} parent=1 // pred_fallthru
      _
    // Predicated region
    $region34: #{tpu_custom_call.1} parent=1 // pred_check
      _
    $region35: #{tpu_custom_call.1} parent=1 // pred_check_branch
      %41 = sbr.rel (0) target = $region37
    $region36: #{tpu_custom_call.1} parent=1 // pred_region
      _
    $region37: #{tpu_custom_call.1} parent=1 // pred_fallthru
      _
    // Predicated region
    $region38: #{tpu_custom_call.1} parent=1 // pred_check
      _
    $region39: #{tpu_custom_call.1} parent=1 // pred_check_branch
      %43 = sbr.rel (0) target = $region41
    $region40: #{tpu_custom_call.1} parent=1 // pred_region
      _
    $region41: #{tpu_custom_call.1} parent=1 // pred_fallthru
      _
    // Predicated region
    $region42: #{tpu_custom_call.1} parent=1 // pred_check
      _
    $region43: #{tpu_custom_call.1} parent=1 // pred_check_branch
      %45 = sbr.rel (0) target = $region45
    $region44: #{tpu_custom_call.1} parent=1 // pred_region
      _
    $region45: #{tpu_custom_call.1} parent=1 // pred_fallthru
      _
    // Predicated region
    $region46: #{tpu_custom_call.1} parent=1 // pred_check
      _
    $region47: #{tpu_custom_call.1} parent=1 // pred_check_branch
      %47 = sbr.rel (0) target = $region49
    $region48: #{tpu_custom_call.1} parent=1 // pred_region
      _
    $region49: #{tpu_custom_call.1} parent=1 // pred_fallthru
      _
    // Predicated region
    $region50: #{tpu_custom_call.1} parent=1 // pred_check
      _
    $region51: #{tpu_custom_call.1} parent=1 // pred_check_branch
      %49 = sbr.rel (0) target = $region53
    $region52: #{tpu_custom_call.1} parent=1 // pred_region
      _
    $region53: #{tpu_custom_call.1} parent=1 // pred_fallthru
      _
    // Predicated region
    $region54: #{tpu_custom_call.1} parent=1 // pred_check
      _
    $region55: #{tpu_custom_call.1} parent=1 // pred_check_branch
      %51 = sbr.rel (0) target = $region57
    $region56: #{tpu_custom_call.1} parent=1 // pred_region
      _
    $region57: #{tpu_custom_call.1} parent=1 // pred_fallthru
      _
    // Predicated region
    $region58: #{tpu_custom_call.1} parent=1 // pred_check
      _
    $region59: #{tpu_custom_call.1} parent=1 // pred_check_branch
      %53 = sbr.rel (0) target = $region61
    $region60: #{tpu_custom_call.1} parent=1 // pred_region
      _
    $region61: #{tpu_custom_call.1} parent=1 // pred_fallthru
      _
    // Predicated region
    $region62: #{tpu_custom_call.1} parent=1 // pred_check
      _
    $region63: #{tpu_custom_call.1} parent=1 // pred_check_branch
      %55 = sbr.rel (0) target = $region65
    $region64: #{tpu_custom_call.1} parent=1 // pred_region
      _
    $region65: #{tpu_custom_call.1} parent=1 // pred_fallthru
      _
    // Predicated region
    $region66: #{tpu_custom_call.1} parent=1 // pred_check
      _
    $region67: #{tpu_custom_call.1} parent=1 // pred_check_branch
      %57 = sbr.rel (0) target = $region69
    $region68: #{tpu_custom_call.1} parent=1 // pred_region
      _
    $region69: #{tpu_custom_call.1} parent=1 // pred_fallthru
      _
    // Predicated region
    $region70: #{tpu_custom_call.1} parent=1 // pred_check
      _
    $region71: #{tpu_custom_call.1} parent=1 // pred_check_branch
      %59 = sbr.rel (0) target = $region73
    $region72: #{tpu_custom_call.1} parent=1 // pred_region
      _
    $region73: #{tpu_custom_call.1} parent=1 // pred_fallthru
      _
    %v60 = vld [vmem:[%s3] sm:$0xff]
    %v61 = vld [vmem:[%s3 + $0x8] sm:$0xff]
    %v62 = vld [vmem:[%s3 + $0x10] sm:$0xff]
    %v63 = vld [vmem:[%s4] sm:$0xff]
    %v64 = vld [vmem:[%s4 + $0x8] sm:$0xff]
    %v65 = vld [vmem:[%s4 + $0x10] sm:$0xff]
    %v66 = vld [vmem:[%s5] sm:$0xff]
    %v67 = vld [vmem:[%s5 + $0x8] sm:$0xf]
    %v68 = vld [vmem:[%s6] sm:$0xff]
    %v69 = vld [vmem:[%s6 + $0x8] sm:$0xff]
    %v70 = vld [vmem:[%s6 + $0x10] sm:$0xff]
    %v71 = vld [vmem:[%s7] sm:$0xff]
    %v72 = vld [vmem:[%s7 + $0x8] sm:$0xf]
    %v73 = vld [vmem:[%s8] sm:$0x3]
    %v74 = vld [vmem:[%s9] sm:$0xff]
    %v75 = vld [vmem:[%s9 + $0x8] sm:$0xf]
    %v76 = vld [vmem:[%s10] sm:$0x3]
    %v77 = vld [vmem:[%s11] sm:$0xff]
    %v78 = vld [vmem:[%s11 + $0x8] sm:$0xff]
    %v79 = vld [vmem:[%s11 + $0x10] sm:$0x1f]
    %v80 = vld [vmem:[%s12] sm:$0xff]
    %v81 = vld [vmem:[%s12 + $0x8] sm:$0x3f]
    %v82 = vld [vmem:[%s13] sm:$0xff]
    %v83 = vld [vmem:[%s13 + $0x8] sm:$0x3f]
    %v84 = vld [vmem:[%s14] sm:$0xff]
    %v85 = vld [vmem:[%s14 + $0x8] sm:$0xff]
    %v86 = vld [vmem:[%s14 + $0x10] sm:$0xff]
    %v87 = vld [vmem:[%s14 + $0x18] sm:$0xff]
    %v88 = vld [vmem:[%s15] sm:$0xff]
    %v89 = vld [vmem:[%s15 + $0x8] sm:$0x3f]
    %v90 = vld [vmem:[%s16] sm:$0x7]
    %v91 = vld [vmem:[%s17] sm:$0x1]
    %v92 = vld [vmem:[%s0] sm:$0xff]
    %v93 = vld [vmem:[%s0 + $0x8] sm:$0xf]
    %v94 = vld [vmem:[%s1] sm:$0xff]
    %v95 = vld [vmem:[%s1 + $0x8] sm:$0xff]
    %v96 = vld [vmem:[%s1 + $0x10] sm:$0xff]
    %v97 = vld [vmem:[%s2] sm:$0x3]
    %vm98 = vcmask 97280
    %v100 = vsel %vm98, %v60, 0
    %v103 = vsel %vm98, %v61, 0
    %v106 = vsel %vm98, %v62, 0
    %vm108 = vcmask 1043456
    %v110 = vsel %vm108, %v93, 0
    %112 = vmatpush.msra.mxu0 0.0
    %113 = vmatpush.msra.mxu0 0.0
    %114 = vmatpush.msra.mxu0 0.0
    %115 = vmatpush.msra.mxu0 0.0
    %116 = vmatpush.msra.mxu0 0.0
    %117 = vmatpush.msra.mxu0 0.0
    %118 = vmatpush.msra.mxu0 0.0
    %119 = vmatpush.msra.mxu0 0.0
    %120 = vmatpush.msra.mxu0 0.0
    %121 = vmatpush.msra.mxu0 0.0
    %122 = vmatpush.msra.mxu0 0.0
    %123 = vmatpush.msra.mxu0 0.0
    %124 = vmatpush.msra.mxu0 0.0
    %125 = vmatpush.msra.mxu0 0.0
    %126 = vmatpush.msra.mxu0 %v110
    %127 = vmatpush.msra.mxu0 %v92
    %128 = vmatmul.f32.gmra.mxu0 %v100
    %v129 = vpop.f32.mrf.mxu0
    %v130 = vadd.f32 0.0, %v129
    %131 = vmatmul.f32.gmra.mxu0 %v103
    %v132 = vpop.f32.mrf.mxu0
    %v133 = vadd.f32 0.0, %v132
    %134 = vmatmul.f32.gmra.mxu0 %v106
    %v135 = vpop.f32.mrf.mxu0
    %v136 = vadd.f32 0.0, %v135
    %137 = vdwg.mxu0
    %v139 = vsel %vm98, %v63, 0
    %v142 = vsel %vm98, %v64, 0
    %v145 = vsel %vm98, %v65, 0
    %147 = vmatpush.msra.mxu0 0.0
    %148 = vmatpush.msra.mxu0 0.0
    %149 = vmatpush.msra.mxu0 0.0
    %150 = vmatpush.msra.mxu0 0.0
    %151 = vmatpush.msra.mxu0 0.0
    %152 = vmatpush.msra.mxu0 0.0
    %153 = vmatpush.msra.mxu0 0.0
    %154 = vmatpush.msra.mxu0 0.0
    %155 = vmatpush.msra.mxu0 0.0
    %156 = vmatpush.msra.mxu0 0.0
    %157 = vmatpush.msra.mxu0 0.0
    %158 = vmatpush.msra.mxu0 0.0
    %159 = vmatpush.msra.mxu0 0.0
    %160 = vmatpush.msra.mxu0 0.0
    %161 = vmatpush.msra.mxu0 %v110
    %162 = vmatpush.msra.mxu0 %v92
    %163 = vmatmul.f32.gmra.mxu0 %v139
    %v164 = vpop.f32.mrf.mxu0
    %v165 = vadd.f32 0.0, %v164
    %166 = vmatmul.f32.gmra.mxu0 %v142
    %v167 = vpop.f32.mrf.mxu0
    %v168 = vadd.f32 0.0, %v167
    %169 = vmatmul.f32.gmra.mxu0 %v145
    %v170 = vpop.f32.mrf.mxu0
    %v171 = vadd.f32 0.0, %v170
    %172 = vdwg.mxu0
    %vm173 = vcmask 15360
    %v175 = vsel %vm173, %v68, 0
    %v178 = vsel %vm173, %v69, 0
    %v181 = vsel %vm173, %v70, 0
    %vm183 = vcmask 1041408
    %v185 = vsel %vm183, %v97, 0
    %187 = vmatpush.msra.mxu0 0.0
    %188 = vmatpush.msra.mxu0 0.0
    %189 = vmatpush.msra.mxu0 0.0
    %190 = vmatpush.msra.mxu0 0.0
    %191 = vmatpush.msra.mxu0 0.0
    %192 = vmatpush.msra.mxu0 0.0
    %193 = vmatpush.msra.mxu0 0.0
    %194 = vmatpush.msra.mxu0 0.0
    %195 = vmatpush.msra.mxu0 0.0
    %196 = vmatpush.msra.mxu0 0.0
    %197 = vmatpush.msra.mxu0 0.0
    %198 = vmatpush.msra.mxu0 0.0
    %199 = vmatpush.msra.mxu0 0.0
    %200 = vmatpush.msra.mxu0 0.0
    %201 = vmatpush.msra.mxu0 0.0
    %202 = vmatpush.msra.mxu0 %v185
    %203 = vmatmul.f32.gmra.mxu0 %v175
    %v204 = vpop.f32.mrf.mxu0
    %v205 = vadd.f32 0.0, %v204
    %206 = vmatmul.f32.gmra.mxu0 %v178
    %v207 = vpop.f32.mrf.mxu0
    %v208 = vadd.f32 0.0, %v207
    %209 = vmatmul.f32.gmra.mxu0 %v181
    %v210 = vpop.f32.mrf.mxu0
    %v211 = vadd.f32 0.0, %v210
    %212 = vdwg.mxu0
    %216 = vrot.lane.b32.xlu0 %v165, 7
    %v217 = vpop.permute.xlu0 %216
    %218 = vrot.lane.b32.xlu0 %v168, 7
    %v219 = vpop.permute.xlu0 %218
    %220 = vrot.lane.b32.xlu0 %v171, 7
    %v221 = vpop.permute.xlu0 %220
    %228 = vrot.lane.b32.xlu0 %v94, 14
    %v229 = vpop.permute.xlu0 %228
    %230 = vrot.lane.b32.xlu0 %v95, 14
    %v231 = vpop.permute.xlu0 %230
    %232 = vrot.lane.b32.xlu0 %v96, 14
    %v233 = vpop.permute.xlu0 %232
    %240 = vrot.lane.b32.xlu0 %v205, 18
    %v241 = vpop.permute.xlu0 %240
    %242 = vrot.lane.b32.xlu0 %v208, 18
    %v243 = vpop.permute.xlu0 %242
    %244 = vrot.lane.b32.xlu0 %v211, 18
    %v245 = vpop.permute.xlu0 %244
    %vm249 = vcmask 56320
    %v250 = vsel %vm249, %v130, %v217
    %v251 = vsel %vm249, %v133, %v219
    %v252 = vsel %vm249, %v136, %v221
    %vm253 = vcmask 113664
    %v254 = vsel %vm253, %v250, %v229
    %v255 = vsel %vm253, %v251, %v231
    %v256 = vsel %vm253, %v252, %v233
    %vm257 = vcmask 146432
    %v258 = vsel %vm257, %v254, %v241
    %v259 = vsel %vm257, %v255, %v243
    %v260 = vsel %vm257, %v256, %v245
    %v261 = vperm.slane %v90, 0
    %vm262 = vcmask 171008
    %v264 = vsel %vm262, %v258, 0
    %v267 = vsel %vm262, %v259, 0
    %v270 = vsel %vm262, %v260, 0
    %vm272 = vcmask 1044480
    %v274 = vsel %vm272, %v79, 0
    %276 = vmatpush.msra.mxu0 0.0
    %277 = vmatpush.msra.mxu0 0.0
    %278 = vmatpush.msra.mxu0 0.0
    %279 = vmatpush.msra.mxu0 0.0
    %280 = vmatpush.msra.mxu0 0.0
    %281 = vmatpush.msra.mxu0 0.0
    %282 = vmatpush.msra.mxu0 0.0
    %283 = vmatpush.msra.mxu0 0.0
    %284 = vmatpush.msra.mxu0 0.0
    %285 = vmatpush.msra.mxu0 0.0
    %286 = vmatpush.msra.mxu0 0.0
    %287 = vmatpush.msra.mxu0 0.0
    %288 = vmatpush.msra.mxu0 0.0
    %289 = vmatpush.msra.mxu0 %v274
    %290 = vmatpush.msra.mxu0 %v78
    %291 = vmatpush.msra.mxu0 %v77
    %292 = vmatmul.f32.gmra.mxu0 %v264
    %v293 = vpop.f32.mrf.mxu0
    %v294 = vadd.f32 %v261, %v293
    %295 = vmatmul.f32.gmra.mxu0 %v267
    %v296 = vpop.f32.mrf.mxu0
    %v297 = vadd.f32 %v261, %v296
    %298 = vmatmul.f32.gmra.mxu0 %v270
    %v299 = vpop.f32.mrf.mxu0
    %v300 = vadd.f32 %v261, %v299
    %301 = vdwg.mxu0
    %v302 = vmax.f32 %v294, 0.0
    %v303 = vmax.f32 %v297, 0.0
    %v304 = vmax.f32 %v300, 0.0
    %v306 = vperm.slane %v91, 0
    %vm308 = vcmask 261120
    %v310 = vsel %vm308, %v302, 0
    %v313 = vsel %vm308, %v303, 0
    %v316 = vsel %vm308, %v304, 0
    %318 = vmatpush.msra.mxu0 0.0
    %319 = vmatpush.msra.mxu0 0.0
    %320 = vmatpush.msra.mxu0 0.0
    %321 = vmatpush.msra.mxu0 0.0
    %322 = vmatpush.msra.mxu0 0.0
    %323 = vmatpush.msra.mxu0 0.0
    %324 = vmatpush.msra.mxu0 0.0
    %325 = vmatpush.msra.mxu0 0.0
    %326 = vmatpush.msra.mxu0 0.0
    %327 = vmatpush.msra.mxu0 0.0
    %328 = vmatpush.msra.mxu0 0.0
    %329 = vmatpush.msra.mxu0 0.0
    %330 = vmatpush.msra.mxu0 %v87
    %331 = vmatpush.msra.mxu0 %v86
    %332 = vmatpush.msra.mxu0 %v85
    %333 = vmatpush.msra.mxu0 %v84
    %334 = vmatmul.f32.gmra.mxu0 %v310
    %v335 = vpop.f32.mrf.mxu0
    %v336 = vadd.f32 %v306, %v335
    %337 = vmatmul.f32.gmra.mxu0 %v313
    %v338 = vpop.f32.mrf.mxu0
    %v339 = vadd.f32 %v306, %v338
    %340 = vmatmul.f32.gmra.mxu0 %v316
    %v341 = vpop.f32.mrf.mxu0
    %v342 = vadd.f32 %v306, %v341
    %343 = vdwg.mxu0
    %vm344 = vcmask 195584
    %v346 = vsel %vm344, %v66, 0
    %v349 = vsel %vm344, %v67, 0
    %351 = vmatpush.msra.mxu0 0.0
    %352 = vmatpush.msra.mxu0 0.0
    %353 = vmatpush.msra.mxu0 0.0
    %354 = vmatpush.msra.mxu0 0.0
    %355 = vmatpush.msra.mxu0 0.0
    %356 = vmatpush.msra.mxu0 0.0
    %357 = vmatpush.msra.mxu0 0.0
    %358 = vmatpush.msra.mxu0 0.0
    %359 = vmatpush.msra.mxu0 0.0
    %360 = vmatpush.msra.mxu0 0.0
    %361 = vmatpush.msra.mxu0 0.0
    %362 = vmatpush.msra.mxu0 0.0
    %363 = vmatpush.msra.mxu0 0.0
    %364 = vmatpush.msra.mxu0 %v342
    %365 = vmatpush.msra.mxu0 %v339
    %366 = vmatpush.msra.mxu0 %v336
    %367 = vmatmul.f32.gmra.mxu0 %v346
    %v368 = vpop.f32.mrf.mxu0
    %v369 = vadd.f32 0.0, %v368
    %370 = vmatmul.f32.gmra.mxu0 %v349
    %v371 = vpop.f32.mrf.mxu0
    %v372 = vadd.f32 0.0, %v371
    %373 = vdwg.mxu0
    %375 = vset.pattern.permute.xlu0 0
    %376 = vperm.xlu0 %375, %v74
    %v377 = vpop.permute.xlu0 %376
    %380 = vset.pattern.permute.xlu0 0
    %381 = vperm.xlu0 %380, %v75
    %v382 = vpop.permute.xlu0 %381
    %v384 = vmul.f32 %v369, %v377
    %v385 = vmul.f32 %v372, %v382
    %v387 = vsel %vm173, %v71, 0
    %v390 = vsel %vm173, %v72, 0
    %392 = vmatpush.msra.mxu0 0.0
    %393 = vmatpush.msra.mxu0 0.0
    %394 = vmatpush.msra.mxu0 0.0
    %395 = vmatpush.msra.mxu0 0.0
    %396 = vmatpush.msra.mxu0 0.0
    %397 = vmatpush.msra.mxu0 0.0
    %398 = vmatpush.msra.mxu0 0.0
    %399 = vmatpush.msra.mxu0 0.0
    %400 = vmatpush.msra.mxu0 0.0
    %401 = vmatpush.msra.mxu0 0.0
    %402 = vmatpush.msra.mxu0 0.0
    %403 = vmatpush.msra.mxu0 0.0
    %404 = vmatpush.msra.mxu0 0.0
    %405 = vmatpush.msra.mxu0 0.0
    %406 = vmatpush.msra.mxu0 0.0
    %407 = vmatpush.msra.mxu0 %v185
    %408 = vmatmul.f32.gmra.mxu0 %v387
    %v409 = vpop.f32.mrf.mxu0
    %v410 = vadd.f32 0.0, %v409
    %411 = vmatmul.f32.gmra.mxu0 %v390
    %v412 = vpop.f32.mrf.mxu0
    %v413 = vadd.f32 0.0, %v412
    %414 = vdwg.mxu0
    %417 = vrot.lane.b32.xlu0 %v384, 7
    %v418 = vpop.permute.xlu0 %417
    %419 = vrot.lane.b32.xlu0 %v385, 7
    %v420 = vpop.permute.xlu0 %419
    %425 = vrot.lane.b32.xlu0 %v410, 11
    %v426 = vpop.permute.xlu0 %425
    %427 = vrot.lane.b32.xlu0 %v413, 11
    %v428 = vpop.permute.xlu0 %427
    %v431 = vsel %vm249, %v92, %v418
    %v432 = vsel %vm249, %v93, %v420
    %vm433 = vcmask 89088
    %v434 = vsel %vm433, %v431, %v426
    %v435 = vsel %vm433, %v432, %v428
    %v436 = vperm.slane %v90, 1
    %v438 = vsel %vm253, %v434, 0
    %v441 = vsel %vm253, %v435, 0
    %vm443 = vcmask 1045504
    %v445 = vsel %vm443, %v81, 0
    %447 = vmatpush.msra.mxu0 0.0
    %448 = vmatpush.msra.mxu0 0.0
    %449 = vmatpush.msra.mxu0 0.0
    %450 = vmatpush.msra.mxu0 0.0
    %451 = vmatpush.msra.mxu0 0.0
    %452 = vmatpush.msra.mxu0 0.0
    %453 = vmatpush.msra.mxu0 0.0
    %454 = vmatpush.msra.mxu0 0.0
    %455 = vmatpush.msra.mxu0 0.0
    %456 = vmatpush.msra.mxu0 0.0
    %457 = vmatpush.msra.mxu0 0.0
    %458 = vmatpush.msra.mxu0 0.0
    %459 = vmatpush.msra.mxu0 0.0
    %460 = vmatpush.msra.mxu0 0.0
    %461 = vmatpush.msra.mxu0 %v445
    %462 = vmatpush.msra.mxu0 %v80
    %463 = vmatmul.f32.gmra.mxu0 %v438
    %v464 = vpop.f32.mrf.mxu0
    %v465 = vadd.f32 %v436, %v464
    %466 = vmatmul.f32.gmra.mxu0 %v441
    %v467 = vpop.f32.mrf.mxu0
    %v468 = vadd.f32 %v436, %v467
    %469 = vdwg.mxu0
    %v470 = vmax.f32 %v465, 0.0
    %v471 = vmax.f32 %v468, 0.0
    %476 = vrot.lane.b32.xlu0 %v84, 124
    %v477 = vpop.permute.xlu0 %476
    %478 = vrot.lane.b32.xlu0 %v85, 124
    %v479 = vpop.permute.xlu0 %478
    %480 = vrot.lane.b32.xlu0 %v86, 124
    %v481 = vpop.permute.xlu0 %480
    %482 = vrot.lane.b32.xlu0 %v87, 124
    %v483 = vpop.permute.xlu0 %482
    %488 = vrot.lane.b32.xlu0 %v306, 124
    %v489 = vpop.permute.xlu0 %488
    %v492 = vsel %vm308, %v470, 0
    %v495 = vsel %vm308, %v471, 0
    %497 = vmatpush.msra.mxu0 0.0
    %498 = vmatpush.msra.mxu0 0.0
    %499 = vmatpush.msra.mxu0 0.0
    %500 = vmatpush.msra.mxu0 0.0
    %501 = vmatpush.msra.mxu0 0.0
    %502 = vmatpush.msra.mxu0 0.0
    %503 = vmatpush.msra.mxu0 0.0
    %504 = vmatpush.msra.mxu0 0.0
    %505 = vmatpush.msra.mxu0 0.0
    %506 = vmatpush.msra.mxu0 0.0
    %507 = vmatpush.msra.mxu0 0.0
    %508 = vmatpush.msra.mxu0 0.0
    %509 = vmatpush.msra.mxu0 %v483
    %510 = vmatpush.msra.mxu0 %v481
    %511 = vmatpush.msra.mxu0 %v479
    %512 = vmatpush.msra.mxu0 %v477
    %513 = vmatmul.f32.gmra.mxu0 %v492
    %v514 = vpop.f32.mrf.mxu0
    %v515 = vadd.f32 %v489, %v514
    %516 = vmatmul.f32.gmra.mxu0 %v495
    %v517 = vpop.f32.mrf.mxu0
    %v518 = vadd.f32 %v489, %v517
    %519 = vdwg.mxu0
    %v521 = vsel %vm98, %v73, 0
    %v524 = vsel %vm108, %v518, 0
    %526 = vmatpush.msra.mxu0 0.0
    %527 = vmatpush.msra.mxu0 0.0
    %528 = vmatpush.msra.mxu0 0.0
    %529 = vmatpush.msra.mxu0 0.0
    %530 = vmatpush.msra.mxu0 0.0
    %531 = vmatpush.msra.mxu0 0.0
    %532 = vmatpush.msra.mxu0 0.0
    %533 = vmatpush.msra.mxu0 0.0
    %534 = vmatpush.msra.mxu0 0.0
    %535 = vmatpush.msra.mxu0 0.0
    %536 = vmatpush.msra.mxu0 0.0
    %537 = vmatpush.msra.mxu0 0.0
    %538 = vmatpush.msra.mxu0 0.0
    %539 = vmatpush.msra.mxu0 0.0
    %540 = vmatpush.msra.mxu0 %v524
    %541 = vmatpush.msra.mxu0 %v515
    %542 = vmatmul.f32.gmra.mxu0 %v521
    %v543 = vpop.f32.mrf.mxu0
    %v544 = vadd.f32 0.0, %v543
    %545 = vdwg.mxu0
    %547 = vset.pattern.permute.xlu0 0
    %548 = vperm.xlu0 %547, %v76
    %v549 = vpop.permute.xlu0 %548
    %v551 = vmul.f32 %v544, %v549
    %v552 = vsel %vm108, %v385, 0
    %554 = vmatpush.msra.mxu0 0.0
    %555 = vmatpush.msra.mxu0 0.0
    %556 = vmatpush.msra.mxu0 0.0
    %557 = vmatpush.msra.mxu0 0.0
    %558 = vmatpush.msra.mxu0 0.0
    %559 = vmatpush.msra.mxu0 0.0
    %560 = vmatpush.msra.mxu0 0.0
    %561 = vmatpush.msra.mxu0 0.0
    %562 = vmatpush.msra.mxu0 0.0
    %563 = vmatpush.msra.mxu0 0.0
    %564 = vmatpush.msra.mxu0 0.0
    %565 = vmatpush.msra.mxu0 0.0
    %566 = vmatpush.msra.mxu0 0.0
    %567 = vmatpush.msra.mxu0 0.0
    %568 = vmatpush.msra.mxu0 %v552
    %569 = vmatpush.msra.mxu0 %v384
    %570 = vmatmul.f32.gmra.mxu0 %v521
    %v571 = vpop.f32.mrf.mxu0
    %v572 = vadd.f32 0.0, %v571
    %573 = vdwg.mxu0
    %v574 = vmul.f32 %v572, %v549
    %576 = vrot.lane.b32.xlu0 %v551, 3
    %v577 = vpop.permute.xlu0 %576
    %580 = vrot.lane.b32.xlu0 %v574, 10
    %v581 = vpop.permute.xlu0 %580
    %vm583 = vcmask 23552
    %v584 = vsel %vm583, %v97, %v577
    %vm585 = vcmask 80896
    %v586 = vsel %vm585, %v584, %v581
    %v587 = vperm.slane %v90, 2
    %v589 = vsel %vm253, %v586, 0
    %v592 = vsel %vm443, %v83, 0
    %594 = vmatpush.msra.mxu0 0.0
    %595 = vmatpush.msra.mxu0 0.0
    %596 = vmatpush.msra.mxu0 0.0
    %597 = vmatpush.msra.mxu0 0.0
    %598 = vmatpush.msra.mxu0 0.0
    %599 = vmatpush.msra.mxu0 0.0
    %600 = vmatpush.msra.mxu0 0.0
    %601 = vmatpush.msra.mxu0 0.0
    %602 = vmatpush.msra.mxu0 0.0
    %603 = vmatpush.msra.mxu0 0.0
    %604 = vmatpush.msra.mxu0 0.0
    %605 = vmatpush.msra.mxu0 0.0
    %606 = vmatpush.msra.mxu0 0.0
    %607 = vmatpush.msra.mxu0 0.0
    %608 = vmatpush.msra.mxu0 %v592
    %609 = vmatpush.msra.mxu0 %v82
    %610 = vmatmul.f32.gmra.mxu0 %v589
    %v611 = vpop.f32.mrf.mxu0
    %v612 = vadd.f32 %v587, %v611
    %613 = vdwg.mxu0
    %v614 = vmax.f32 %v612, 0.0
    %615 = vrot.lane.b32.xlu0 %v84, 117
    %v616 = vpop.permute.xlu0 %615
    %617 = vrot.lane.b32.xlu0 %v85, 117
    %v618 = vpop.permute.xlu0 %617
    %619 = vrot.lane.b32.xlu0 %v86, 117
    %v620 = vpop.permute.xlu0 %619
    %621 = vrot.lane.b32.xlu0 %v87, 117
    %v622 = vpop.permute.xlu0 %621
    %627 = vrot.lane.b32.xlu0 %v306, 117
    %v628 = vpop.permute.xlu0 %627
    %v631 = vsel %vm308, %v614, 0
    %633 = vmatpush.msra.mxu0 0.0
    %634 = vmatpush.msra.mxu0 0.0
    %635 = vmatpush.msra.mxu0 0.0
    %636 = vmatpush.msra.mxu0 0.0
    %637 = vmatpush.msra.mxu0 0.0
    %638 = vmatpush.msra.mxu0 0.0
    %639 = vmatpush.msra.mxu0 0.0
    %640 = vmatpush.msra.mxu0 0.0
    %641 = vmatpush.msra.mxu0 0.0
    %642 = vmatpush.msra.mxu0 0.0
    %643 = vmatpush.msra.mxu0 0.0
    %644 = vmatpush.msra.mxu0 0.0
    %645 = vmatpush.msra.mxu0 %v622
    %646 = vmatpush.msra.mxu0 %v620
    %647 = vmatpush.msra.mxu0 %v618
    %648 = vmatpush.msra.mxu0 %v616
    %649 = vmatmul.f32.gmra.mxu0 %v631
    %v650 = vpop.f32.mrf.mxu0
    %v651 = vadd.f32 %v628, %v650
    %652 = vdwg.mxu0
    %653 = vmatpush.msra.mxu0 0.0
    %654 = vmatpush.msra.mxu0 0.0
    %655 = vmatpush.msra.mxu0 0.0
    %656 = vmatpush.msra.mxu0 0.0
    %657 = vmatpush.msra.mxu0 0.0
    %658 = vmatpush.msra.mxu0 0.0
    %659 = vmatpush.msra.mxu0 0.0
    %660 = vmatpush.msra.mxu0 0.0
    %661 = vmatpush.msra.mxu0 0.0
    %662 = vmatpush.msra.mxu0 0.0
    %663 = vmatpush.msra.mxu0 0.0
    %664 = vmatpush.msra.mxu0 0.0
    %665 = vmatpush.msra.mxu0 0.0
    %666 = vmatpush.msra.mxu0 0.0
    %667 = vmatpush.msra.mxu0 %v524
    %668 = vmatpush.msra.mxu0 %v515
    %669 = vmatmul.f32.gmra.mxu0 %v100
    %v670 = vpop.f32.mrf.mxu0
    %v671 = vadd.f32 0.0, %v670
    %672 = vmatmul.f32.gmra.mxu0 %v103
    %v673 = vpop.f32.mrf.mxu0
    %v674 = vadd.f32 0.0, %v673
    %675 = vmatmul.f32.gmra.mxu0 %v106
    %v676 = vpop.f32.mrf.mxu0
    %v677 = vadd.f32 0.0, %v676
    %678 = vdwg.mxu0
    %679 = vmatpush.msra.mxu0 0.0
    %680 = vmatpush.msra.mxu0 0.0
    %681 = vmatpush.msra.mxu0 0.0
    %682 = vmatpush.msra.mxu0 0.0
    %683 = vmatpush.msra.mxu0 0.0
    %684 = vmatpush.msra.mxu0 0.0
    %685 = vmatpush.msra.mxu0 0.0
    %686 = vmatpush.msra.mxu0 0.0
    %687 = vmatpush.msra.mxu0 0.0
    %688 = vmatpush.msra.mxu0 0.0
    %689 = vmatpush.msra.mxu0 0.0
    %690 = vmatpush.msra.mxu0 0.0
    %691 = vmatpush.msra.mxu0 0.0
    %692 = vmatpush.msra.mxu0 0.0
    %693 = vmatpush.msra.mxu0 %v524
    %694 = vmatpush.msra.mxu0 %v515
    %695 = vmatmul.f32.gmra.mxu0 %v139
    %v696 = vpop.f32.mrf.mxu0
    %v697 = vadd.f32 0.0, %v696
    %698 = vmatmul.f32.gmra.mxu0 %v142
    %v699 = vpop.f32.mrf.mxu0
    %v700 = vadd.f32 0.0, %v699
    %701 = vmatmul.f32.gmra.mxu0 %v145
    %v702 = vpop.f32.mrf.mxu0
    %v703 = vadd.f32 0.0, %v702
    %704 = vdwg.mxu0
    %v706 = vsel %vm183, %v651, 0
    %708 = vmatpush.msra.mxu0 0.0
    %709 = vmatpush.msra.mxu0 0.0
    %710 = vmatpush.msra.mxu0 0.0
    %711 = vmatpush.msra.mxu0 0.0
    %712 = vmatpush.msra.mxu0 0.0
    %713 = vmatpush.msra.mxu0 0.0
    %714 = vmatpush.msra.mxu0 0.0
    %715 = vmatpush.msra.mxu0 0.0
    %716 = vmatpush.msra.mxu0 0.0
    %717 = vmatpush.msra.mxu0 0.0
    %718 = vmatpush.msra.mxu0 0.0
    %719 = vmatpush.msra.mxu0 0.0
    %720 = vmatpush.msra.mxu0 0.0
    %721 = vmatpush.msra.mxu0 0.0
    %722 = vmatpush.msra.mxu0 0.0
    %723 = vmatpush.msra.mxu0 %v706
    %724 = vmatmul.f32.gmra.mxu0 %v175
    %v725 = vpop.f32.mrf.mxu0
    %v726 = vadd.f32 0.0, %v725
    %727 = vmatmul.f32.gmra.mxu0 %v178
    %v728 = vpop.f32.mrf.mxu0
    %v729 = vadd.f32 0.0, %v728
    %730 = vmatmul.f32.gmra.mxu0 %v181
    %v731 = vpop.f32.mrf.mxu0
    %v732 = vadd.f32 0.0, %v731
    %733 = vdwg.mxu0
    %737 = vrot.lane.b32.xlu0 %v697, 7
    %v738 = vpop.permute.xlu0 %737
    %739 = vrot.lane.b32.xlu0 %v700, 7
    %v740 = vpop.permute.xlu0 %739
    %741 = vrot.lane.b32.xlu0 %v703, 7
    %v742 = vpop.permute.xlu0 %741
    %749 = vrot.lane.b32.xlu0 %v336, 14
    %v750 = vpop.permute.xlu0 %749
    %751 = vrot.lane.b32.xlu0 %v339, 14
    %v752 = vpop.permute.xlu0 %751
    %753 = vrot.lane.b32.xlu0 %v342, 14
    %v754 = vpop.permute.xlu0 %753
    %761 = vrot.lane.b32.xlu0 %v726, 18
    %v762 = vpop.permute.xlu0 %761
    %763 = vrot.lane.b32.xlu0 %v729, 18
    %v764 = vpop.permute.xlu0 %763
    %765 = vrot.lane.b32.xlu0 %v732, 18
    %v766 = vpop.permute.xlu0 %765
    %v770 = vsel %vm249, %v671, %v738
    %v771 = vsel %vm249, %v674, %v740
    %v772 = vsel %vm249, %v677, %v742
    %v773 = vsel %vm253, %v770, %v750
    %v774 = vsel %vm253, %v771, %v752
    %v775 = vsel %vm253, %v772, %v754
    %v776 = vsel %vm257, %v773, %v762
    %v777 = vsel %vm257, %v774, %v764
    %v778 = vsel %vm257, %v775, %v766
    %v780 = vsel %vm262, %v776, 0
    %v783 = vsel %vm262, %v777, 0
    %v786 = vsel %vm262, %v778, 0
    %788 = vmatpush.msra.mxu0 0.0
    %789 = vmatpush.msra.mxu0 0.0
    %790 = vmatpush.msra.mxu0 0.0
    %791 = vmatpush.msra.mxu0 0.0
    %792 = vmatpush.msra.mxu0 0.0
    %793 = vmatpush.msra.mxu0 0.0
    %794 = vmatpush.msra.mxu0 0.0
    %795 = vmatpush.msra.mxu0 0.0
    %796 = vmatpush.msra.mxu0 0.0
    %797 = vmatpush.msra.mxu0 0.0
    %798 = vmatpush.msra.mxu0 0.0
    %799 = vmatpush.msra.mxu0 0.0
    %800 = vmatpush.msra.mxu0 0.0
    %801 = vmatpush.msra.mxu0 %v274
    %802 = vmatpush.msra.mxu0 %v78
    %803 = vmatpush.msra.mxu0 %v77
    %804 = vmatmul.f32.gmra.mxu0 %v780
    %v805 = vpop.f32.mrf.mxu0
    %v806 = vadd.f32 %v261, %v805
    %807 = vmatmul.f32.gmra.mxu0 %v783
    %v808 = vpop.f32.mrf.mxu0
    %v809 = vadd.f32 %v261, %v808
    %810 = vmatmul.f32.gmra.mxu0 %v786
    %v811 = vpop.f32.mrf.mxu0
    %v812 = vadd.f32 %v261, %v811
    %813 = vdwg.mxu0
    %v814 = vmax.f32 %v806, 0.0
    %v815 = vmax.f32 %v809, 0.0
    %v816 = vmax.f32 %v812, 0.0
    %v818 = vsel %vm308, %v814, 0
    %v821 = vsel %vm308, %v815, 0
    %v824 = vsel %vm308, %v816, 0
    %826 = vmatpush.msra.mxu0 0.0
    %827 = vmatpush.msra.mxu0 0.0
    %828 = vmatpush.msra.mxu0 0.0
    %829 = vmatpush.msra.mxu0 0.0
    %830 = vmatpush.msra.mxu0 0.0
    %831 = vmatpush.msra.mxu0 0.0
    %832 = vmatpush.msra.mxu0 0.0
    %833 = vmatpush.msra.mxu0 0.0
    %834 = vmatpush.msra.mxu0 0.0
    %835 = vmatpush.msra.mxu0 0.0
    %836 = vmatpush.msra.mxu0 0.0
    %837 = vmatpush.msra.mxu0 0.0
    %838 = vmatpush.msra.mxu0 %v87
    %839 = vmatpush.msra.mxu0 %v86
    %840 = vmatpush.msra.mxu0 %v85
    %841 = vmatpush.msra.mxu0 %v84
    %842 = vmatmul.f32.gmra.mxu0 %v818
    %v843 = vpop.f32.mrf.mxu0
    %v844 = vadd.f32 %v306, %v843
    %845 = vmatmul.f32.gmra.mxu0 %v821
    %v846 = vpop.f32.mrf.mxu0
    %v847 = vadd.f32 %v306, %v846
    %848 = vmatmul.f32.gmra.mxu0 %v824
    %v849 = vpop.f32.mrf.mxu0
    %v850 = vadd.f32 %v306, %v849
    %851 = vdwg.mxu0
    %852 = vmatpush.msra.mxu0 0.0
    %853 = vmatpush.msra.mxu0 0.0
    %854 = vmatpush.msra.mxu0 0.0
    %855 = vmatpush.msra.mxu0 0.0
    %856 = vmatpush.msra.mxu0 0.0
    %857 = vmatpush.msra.mxu0 0.0
    %858 = vmatpush.msra.mxu0 0.0
    %859 = vmatpush.msra.mxu0 0.0
    %860 = vmatpush.msra.mxu0 0.0
    %861 = vmatpush.msra.mxu0 0.0
    %862 = vmatpush.msra.mxu0 0.0
    %863 = vmatpush.msra.mxu0 0.0
    %864 = vmatpush.msra.mxu0 0.0
    %865 = vmatpush.msra.mxu0 %v850
    %866 = vmatpush.msra.mxu0 %v847
    %867 = vmatpush.msra.mxu0 %v844
    %868 = vmatmul.f32.gmra.mxu0 %v346
    %v869 = vpop.f32.mrf.mxu0
    %v870 = vadd.f32 0.0, %v869
    %871 = vmatmul.f32.gmra.mxu0 %v349
    %v872 = vpop.f32.mrf.mxu0
    %v873 = vadd.f32 0.0, %v872
    %874 = vdwg.mxu0
    %v875 = vmul.f32 %v870, %v377
    %v876 = vmul.f32 %v873, %v382
    %877 = vmatpush.msra.mxu0 0.0
    %878 = vmatpush.msra.mxu0 0.0
    %879 = vmatpush.msra.mxu0 0.0
    %880 = vmatpush.msra.mxu0 0.0
    %881 = vmatpush.msra.mxu0 0.0
    %882 = vmatpush.msra.mxu0 0.0
    %883 = vmatpush.msra.mxu0 0.0
    %884 = vmatpush.msra.mxu0 0.0
    %885 = vmatpush.msra.mxu0 0.0
    %886 = vmatpush.msra.mxu0 0.0
    %887 = vmatpush.msra.mxu0 0.0
    %888 = vmatpush.msra.mxu0 0.0
    %889 = vmatpush.msra.mxu0 0.0
    %890 = vmatpush.msra.mxu0 0.0
    %891 = vmatpush.msra.mxu0 0.0
    %892 = vmatpush.msra.mxu0 %v706
    %893 = vmatmul.f32.gmra.mxu0 %v387
    %v894 = vpop.f32.mrf.mxu0
    %v895 = vadd.f32 0.0, %v894
    %896 = vmatmul.f32.gmra.mxu0 %v390
    %v897 = vpop.f32.mrf.mxu0
    %v898 = vadd.f32 0.0, %v897
    %899 = vdwg.mxu0
    %902 = vrot.lane.b32.xlu0 %v875, 7
    %v903 = vpop.permute.xlu0 %902
    %904 = vrot.lane.b32.xlu0 %v876, 7
    %v905 = vpop.permute.xlu0 %904
    %910 = vrot.lane.b32.xlu0 %v895, 11
    %v911 = vpop.permute.xlu0 %910
    %912 = vrot.lane.b32.xlu0 %v898, 11
    %v913 = vpop.permute.xlu0 %912
    %v916 = vsel %vm249, %v515, %v903
    %v917 = vsel %vm249, %v518, %v905
    %v918 = vsel %vm433, %v916, %v911
    %v919 = vsel %vm433, %v917, %v913
    %v921 = vsel %vm253, %v918, 0
    %v924 = vsel %vm253, %v919, 0
    %926 = vmatpush.msra.mxu0 0.0
    %927 = vmatpush.msra.mxu0 0.0
    %928 = vmatpush.msra.mxu0 0.0
    %929 = vmatpush.msra.mxu0 0.0
    %930 = vmatpush.msra.mxu0 0.0
    %931 = vmatpush.msra.mxu0 0.0
    %932 = vmatpush.msra.mxu0 0.0
    %933 = vmatpush.msra.mxu0 0.0
    %934 = vmatpush.msra.mxu0 0.0
    %935 = vmatpush.msra.mxu0 0.0
    %936 = vmatpush.msra.mxu0 0.0
    %937 = vmatpush.msra.mxu0 0.0
    %938 = vmatpush.msra.mxu0 0.0
    %939 = vmatpush.msra.mxu0 0.0
    %940 = vmatpush.msra.mxu0 %v445
    %941 = vmatpush.msra.mxu0 %v80
    %942 = vmatmul.f32.gmra.mxu0 %v921
    %v943 = vpop.f32.mrf.mxu0
    %v944 = vadd.f32 %v436, %v943
    %945 = vmatmul.f32.gmra.mxu0 %v924
    %v946 = vpop.f32.mrf.mxu0
    %v947 = vadd.f32 %v436, %v946
    %948 = vdwg.mxu0
    %v949 = vmax.f32 %v944, 0.0
    %v950 = vmax.f32 %v947, 0.0
    %v952 = vsel %vm308, %v949, 0
    %v955 = vsel %vm308, %v950, 0
    %957 = vmatpush.msra.mxu0 0.0
    %958 = vmatpush.msra.mxu0 0.0
    %959 = vmatpush.msra.mxu0 0.0
    %960 = vmatpush.msra.mxu0 0.0
    %961 = vmatpush.msra.mxu0 0.0
    %962 = vmatpush.msra.mxu0 0.0
    %963 = vmatpush.msra.mxu0 0.0
    %964 = vmatpush.msra.mxu0 0.0
    %965 = vmatpush.msra.mxu0 0.0
    %966 = vmatpush.msra.mxu0 0.0
    %967 = vmatpush.msra.mxu0 0.0
    %968 = vmatpush.msra.mxu0 0.0
    %969 = vmatpush.msra.mxu0 %v483
    %970 = vmatpush.msra.mxu0 %v481
    %971 = vmatpush.msra.mxu0 %v479
    %972 = vmatpush.msra.mxu0 %v477
    %973 = vmatmul.f32.gmra.mxu0 %v952
    %v974 = vpop.f32.mrf.mxu0
    %v975 = vadd.f32 %v489, %v974
    %976 = vmatmul.f32.gmra.mxu0 %v955
    %v977 = vpop.f32.mrf.mxu0
    %v978 = vadd.f32 %v489, %v977
    %979 = vdwg.mxu0
    %v981 = vsel %vm108, %v978, 0
    %983 = vmatpush.msra.mxu0 0.0
    %984 = vmatpush.msra.mxu0 0.0
    %985 = vmatpush.msra.mxu0 0.0
    %986 = vmatpush.msra.mxu0 0.0
    %987 = vmatpush.msra.mxu0 0.0
    %988 = vmatpush.msra.mxu0 0.0
    %989 = vmatpush.msra.mxu0 0.0
    %990 = vmatpush.msra.mxu0 0.0
    %991 = vmatpush.msra.mxu0 0.0
    %992 = vmatpush.msra.mxu0 0.0
    %993 = vmatpush.msra.mxu0 0.0
    %994 = vmatpush.msra.mxu0 0.0
    %995 = vmatpush.msra.mxu0 0.0
    %996 = vmatpush.msra.mxu0 0.0
    %997 = vmatpush.msra.mxu0 %v981
    %998 = vmatpush.msra.mxu0 %v975
    %999 = vmatmul.f32.gmra.mxu0 %v521
    %v1000 = vpop.f32.mrf.mxu0
    %v1001 = vadd.f32 0.0, %v1000
    %1002 = vdwg.mxu0
    %v1003 = vmul.f32 %v1001, %v549
    %v1004 = vsel %vm108, %v876, 0
    %1006 = vmatpush.msra.mxu0 0.0
    %1007 = vmatpush.msra.mxu0 0.0
    %1008 = vmatpush.msra.mxu0 0.0
    %1009 = vmatpush.msra.mxu0 0.0
    %1010 = vmatpush.msra.mxu0 0.0
    %1011 = vmatpush.msra.mxu0 0.0
    %1012 = vmatpush.msra.mxu0 0.0
    %1013 = vmatpush.msra.mxu0 0.0
    %1014 = vmatpush.msra.mxu0 0.0
    %1015 = vmatpush.msra.mxu0 0.0
    %1016 = vmatpush.msra.mxu0 0.0
    %1017 = vmatpush.msra.mxu0 0.0
    %1018 = vmatpush.msra.mxu0 0.0
    %1019 = vmatpush.msra.mxu0 0.0
    %1020 = vmatpush.msra.mxu0 %v1004
    %1021 = vmatpush.msra.mxu0 %v875
    %1022 = vmatmul.f32.gmra.mxu0 %v521
    %v1023 = vpop.f32.mrf.mxu0
    %v1024 = vadd.f32 0.0, %v1023
    %1025 = vdwg.mxu0
    %v1026 = vmul.f32 %v1024, %v549
    %1028 = vrot.lane.b32.xlu0 %v1003, 3
    %v1029 = vpop.permute.xlu0 %1028
    %1032 = vrot.lane.b32.xlu0 %v1026, 10
    %v1033 = vpop.permute.xlu0 %1032
    %v1035 = vsel %vm583, %v651, %v1029
    %v1036 = vsel %vm585, %v1035, %v1033
    %v1038 = vsel %vm253, %v1036, 0
    %1040 = vmatpush.msra.mxu0 0.0
    %1041 = vmatpush.msra.mxu0 0.0
    %1042 = vmatpush.msra.mxu0 0.0
    %1043 = vmatpush.msra.mxu0 0.0
    %1044 = vmatpush.msra.mxu0 0.0
    %1045 = vmatpush.msra.mxu0 0.0
    %1046 = vmatpush.msra.mxu0 0.0
    %1047 = vmatpush.msra.mxu0 0.0
    %1048 = vmatpush.msra.mxu0 0.0
    %1049 = vmatpush.msra.mxu0 0.0
    %1050 = vmatpush.msra.mxu0 0.0
    %1051 = vmatpush.msra.mxu0 0.0
    %1052 = vmatpush.msra.mxu0 0.0
    %1053 = vmatpush.msra.mxu0 0.0
    %1054 = vmatpush.msra.mxu0 %v592
    %1055 = vmatpush.msra.mxu0 %v82
    %1056 = vmatmul.f32.gmra.mxu0 %v1038
    %v1057 = vpop.f32.mrf.mxu0
    %v1058 = vadd.f32 %v587, %v1057
    %1059 = vdwg.mxu0
    %v1060 = vmax.f32 %v1058, 0.0
    %v1062 = vsel %vm308, %v1060, 0
    %1064 = vmatpush.msra.mxu0 0.0
    %1065 = vmatpush.msra.mxu0 0.0
    %1066 = vmatpush.msra.mxu0 0.0
    %1067 = vmatpush.msra.mxu0 0.0
    %1068 = vmatpush.msra.mxu0 0.0
    %1069 = vmatpush.msra.mxu0 0.0
    %1070 = vmatpush.msra.mxu0 0.0
    %1071 = vmatpush.msra.mxu0 0.0
    %1072 = vmatpush.msra.mxu0 0.0
    %1073 = vmatpush.msra.mxu0 0.0
    %1074 = vmatpush.msra.mxu0 0.0
    %1075 = vmatpush.msra.mxu0 0.0
    %1076 = vmatpush.msra.mxu0 %v622
    %1077 = vmatpush.msra.mxu0 %v620
    %1078 = vmatpush.msra.mxu0 %v618
    %1079 = vmatpush.msra.mxu0 %v616
    %1080 = vmatmul.f32.gmra.mxu0 %v1062
    %v1081 = vpop.f32.mrf.mxu0
    %v1082 = vadd.f32 %v628, %v1081
    %1083 = vdwg.mxu0
    %1084 = vrot.lane.b32.xlu0 %v1026, 7
    %v1085 = vpop.permute.xlu0 %1084
    %1088 = vrot.lane.b32.xlu0 %v1082, 11
    %v1089 = vpop.permute.xlu0 %1088
    %v1091 = vsel %vm249, %v1003, %v1085
    %v1092 = vsel %vm433, %v1091, %v1089
    %1093 = vrot.lane.b32.xlu0 %v306, 114
    %v1094 = vpop.permute.xlu0 %1093
    %v1097 = vsel %vm253, %v1092, 0
    %v1100 = vsel %vm443, %v89, 0
    %1102 = vmatpush.msra.mxu0 0.0
    %1103 = vmatpush.msra.mxu0 0.0
    %1104 = vmatpush.msra.mxu0 0.0
    %1105 = vmatpush.msra.mxu0 0.0
    %1106 = vmatpush.msra.mxu0 0.0
    %1107 = vmatpush.msra.mxu0 0.0
    %1108 = vmatpush.msra.mxu0 0.0
    %1109 = vmatpush.msra.mxu0 0.0
    %1110 = vmatpush.msra.mxu0 0.0
    %1111 = vmatpush.msra.mxu0 0.0
    %1112 = vmatpush.msra.mxu0 0.0
    %1113 = vmatpush.msra.mxu0 0.0
    %1114 = vmatpush.msra.mxu0 0.0
    %1115 = vmatpush.msra.mxu0 0.0
    %1116 = vmatpush.msra.mxu0 %v1100
    %1117 = vmatpush.msra.mxu0 %v88
    %1118 = vmatmul.f32.gmra.mxu0 %v1097
    %v1119 = vpop.f32.mrf.mxu0
    %v1120 = vadd.f32 %v1094, %v1119
    %1121 = vdwg.mxu0
    %vm1122 = vcmask 9216
    %1123 = vst.msk [vmem:[#allocation2] sm:$0x3] %vm1122, %v1120
    // Predicated region
    $region74: #{tpu_custom_call.1} parent=1 // pred_check
      _
    $region75: #{tpu_custom_call.1} parent=1 // pred_check_branch
      %1125 = sbr.rel (0) target = $region77
    $region76: #{tpu_custom_call.1} parent=1 // pred_region
      %1127 = vsyncadd [#allocation3], 0
      %s1129 = sshll.u32 [#allocation2], 4
      %s1130 = int_to_ptr.vmem [resolvable:$true] %s1129
      %s1131 = sshll.u32 %s18, 4
      %s1132 = int_to_ptr.hbm [resolvable:$true] %s1131
      %1134 = dma.vmem_to_hbm [thread:$0]  %s1130, 32, %s1132, [#allocation3]
    $region77: #{tpu_custom_call.1} parent=1 // pred_fallthru
      _
    // Predicated region
    $region78: #{tpu_custom_call.1} parent=1 // pred_check
      _
    $region79: #{tpu_custom_call.1} parent=1 // pred_check_branch
      %1136 = sbr.rel (0) target = $region81
    $region80: #{tpu_custom_call.1} parent=1 // pred_region
      %1138 = dma.done [#allocation3], 32
    $region81: #{tpu_custom_call.1} parent=1 // pred_fallthru
      _
    %1139 = vsyncpa [#allocation3], 1

</llo_original>
